<compile_context>
chip_gen: v5e
topology: v5e:2x2
jax: 0.10.0
libtpu: 0.0.40
codegen_flags: <defaults>
</compile_context>

<pallas_src>
import jax
import jax.numpy as jnp
from jax.experimental import pallas as pl
from jax.experimental.pallas import tpu as pltpu

THRESHOLD = 1.0


# --------------------------------------------------------------------------
# Kernels
# --------------------------------------------------------------------------
def _gpn_step_kernel(x_ref, v_ref, vreset_ref, w_ref, b_ref, spike_ref, vnew_ref):
    """General recurrent step: z = cat([v, x]) @ W + bias, gated state update."""
    x = x_ref[...]              # (TILE_N, C)
    v = v_ref[...]              # (TILE_N, C)
    v_reset = vreset_ref[...]   # (TILE_N, C)
    C = x.shape[1]

    combined = jnp.concatenate([v, x], axis=1)                    # (TILE_N, 2C)
    z = jnp.dot(combined, w_ref[...],
                preferred_element_type=jnp.float32) + b_ref[...]  # (TILE_N, 3C)

    f = jax.nn.sigmoid(z[:, 0 * C:1 * C])
    i = jax.nn.sigmoid(z[:, 1 * C:2 * C])
    b = jnp.tanh(z[:, 2 * C:3 * C])

    v_hidden = f * v + i * x
    # surrogate.ATan forward pass == heaviside step (x >= 0)
    spiking = v_hidden >= THRESHOLD
    spike_ref[...] = spiking.astype(spike_ref.dtype)
    vnew_ref[...] = jnp.where(spiking, v_reset, v_hidden) + b


def _gpn_first_call_kernel(x_ref, w_ref, b_ref, spike_ref, vnew_ref):
    """Eval-mode first call: v = v_reset = 0, so the v matmul, f-gate columns,
    f*v and spike*v_reset terms are all provably dead."""
    x = x_ref[...]              # (TILE_N, C)
    C = x.shape[1]

    z = jnp.dot(x, w_ref[...],
                preferred_element_type=jnp.float32) + b_ref[...]  # (TILE_N, 2C)
    i = jax.nn.sigmoid(z[:, :C])
    b = jnp.tanh(z[:, C:])

    v_hidden = i * x
    spiking = v_hidden >= THRESHOLD
    spike_ref[...] = spiking.astype(spike_ref.dtype)
    vnew_ref[...] = jnp.where(spiking, 0.0, v_hidden) + b


# --------------------------------------------------------------------------
# Host-side wrappers
# --------------------------------------------------------------------------
def _pick_tile_n(n_rows: int) -> int:
    # Large row tiles amortize the ~0.35 us per-grid-step overhead; 512 rows of
    # five (TILE_N, 128) f32 streams, double buffered, plus the resident
    # (2C, 3C) weight stays well inside v5e's 16 MiB default scoped VMEM.
    tile = min(512, n_rows)
    return max(8, (tile // 8) * 8)


def prepare_params(weight, bias):
    """One-time parameter prep, hoisted out of the per-step path.

    weight: (3C, 2C) in PyTorch nn.Linear layout; bias: (3C,).
    Returns (w_full, b_full, w_x_ib, b_ib):
      w_full : (2C, 3C)  acts on cat([v, x], axis=1)  (single K=2C dot)
      b_full : (1, 3C)
      w_x_ib : (C, 2C)   x-rows, i/b columns only (first-call fast path)
      b_ib   : (1, 2C)
    """
    three_c, two_c = weight.shape
    C = two_c // 2
    assert three_c == 3 * C
    w_full = jnp.asarray(weight).T                 # (2C, 3C)
    b_full = jnp.asarray(bias).reshape(1, 3 * C)
    w_x_ib = w_full[C:, C:]                        # (C, 2C)
    b_ib = b_full[:, C:]                           # (1, 2C)
    return w_full, b_full, w_x_ib, b_ib


def gpn_step(x, v, v_reset, params, *, donate_v=True):
    """General recurrent step. Returns (spike, v_new); v_new overwrites v's
    HBM buffer when donate_v=True (the input `v` array is consumed)."""
    w_full, b_full, _, _ = params
    N, C = x.shape
    tile_n = _pick_tile_n(N)
    row = pl.BlockSpec((tile_n, C), lambda g: (g, 0))
    extra = {"input_output_aliases": {1: 1}} if donate_v else {}
    return pl.pallas_call(
        _gpn_step_kernel,
        out_shape=(jax.ShapeDtypeStruct((N, C), jnp.float32),
                   jax.ShapeDtypeStruct((N, C), jnp.float32)),
        grid=(pl.cdiv(N, tile_n),),
        in_specs=[row, row, row,
                  pl.BlockSpec((2 * C, 3 * C), lambda g: (0, 0)),  # resident weight
                  pl.BlockSpec((1, 3 * C), lambda g: (0, 0))],     # resident bias
        out_specs=(row, row),
        compiler_params=pltpu.CompilerParams(
            dimension_semantics=("parallel",)),
        **extra,
    )(x, v, v_reset, w_full, b_full)


def gpn_first_call(x, params):
    """Eval-mode first call (v = v_reset = 0). Returns (spike, v_new)."""
    _, _, w_x_ib, b_ib = params
    N, C = x.shape
    tile_n = _pick_tile_n(N)
    row = pl.BlockSpec((tile_n, C), lambda g: (g, 0))
    return pl.pallas_call(
        _gpn_first_call_kernel,
        out_shape=(jax.ShapeDtypeStruct((N, C), jnp.float32),
                   jax.ShapeDtypeStruct((N, C), jnp.float32)),
        grid=(pl.cdiv(N, tile_n),),
        in_specs=[row,
                  pl.BlockSpec((C, 2 * C), lambda g: (0, 0)),      # resident weight
                  pl.BlockSpec((1, 2 * C), lambda g: (0, 0))],     # resident bias
        out_specs=(row, row),
        compiler_params=pltpu.CompilerParams(
            dimension_semantics=("parallel",)),
    )(x, w_x_ib, b_ib)


# --------------------------------------------------------------------------
# Pure-JAX reference (mirrors the PyTorch forward exactly)
# --------------------------------------------------------------------------
def gpn_reference(x, v, v_reset, weight, bias):
    C = x.shape[1]
    combined = jnp.concatenate([v, x], axis=1)
    z = combined @ weight.T + bias
    cc_f, cc_i, cc_b = z[:, :C], z[:, C:2 * C], z[:, 2 * C:]
    f = jax.nn.sigmoid(cc_f)
    i = jax.nn.sigmoid(cc_i)
    b = jnp.tanh(cc_b)
    v_hidden = f * v + i * x
    spike = (v_hidden - THRESHOLD >= 0.0).astype(x.dtype)
    v_new = (1.0 - spike) * v_hidden + spike * v_reset + b
    return spike, v_new


# --------------------------------------------------------------------------
# Demo / self-test
# --------------------------------------------------------------------------
if __name__ == "__main__":
    N = 64            # batch rows (small demo; kernel tiles over N)
    C = 128           # input_channels (module default)

    key = jax.random.PRNGKey(0)
    kx, kw, kb = jax.random.split(key, 3)

    x = jax.random.normal(kx, (N, C), dtype=jnp.float32)

    # Deterministic synthetic Linear params (shapes from nn.Linear(2C, 3C)).
    bound = (2.0 * C) ** -0.5
    weight = jax.random.uniform(kw, (3 * C, 2 * C), jnp.float32, -bound, bound)
    bias = jax.random.uniform(kb, (3 * C,), jnp.float32, -bound, bound)

    params = prepare_params(weight, bias)

    # TODO(synk): training-mode v_reset ~ Normal(0, 0.05) init, the ATan surrogate
    # backward, and the MemoryModule reset/detach bookkeeping stay host-side.

    # ---- step 1: eval-mode first call (v = v_reset = 0) -> specialized kernel ----
    v_reset = jnp.zeros((N, C), jnp.float32)
    zeros_v = jnp.zeros((N, C), jnp.float32)

    spike1, v1 = gpn_first_call(x, params)
    jax.block_until_ready((spike1, v1))

    spike1_ref, v1_ref = gpn_reference(x, zeros_v, v_reset, weight, bias)
    assert jnp.array_equal(spike1, spike1_ref), "step-1 spike mismatch"
    assert jnp.allclose(v1, v1_ref, atol=1e-4, rtol=1e-4), "step-1 v mismatch"

    # ---- step 2: recurrent step with carried state -> general kernel ----
    spike2_ref, v2_ref = gpn_reference(x, v1_ref, v_reset, weight, bias)
    spike2, v2 = gpn_step(x, v1, v_reset, params)   # v1 donated; v_new in place
    jax.block_until_ready((spike2, v2))

    assert jnp.array_equal(spike2, spike2_ref), "step-2 spike mismatch"
    assert jnp.allclose(v2, v2_ref, atol=1e-4, rtol=1e-4), "step-2 v mismatch"

    print("KERNEL_OK")
</pallas_src>

<mosaic_0001>
module attributes {stable_mosaic.version = 11 : i64} {
  func.func @_gpn_first_call_kernel(%arg0: i32, %arg1: memref<64x128xf32, #tpu.memory_space<vmem>>, %arg2: memref<128x256xf32, #tpu.memory_space<vmem>>, %arg3: memref<1x256xf32, #tpu.memory_space<vmem>>, %arg4: memref<64x128xf32, #tpu.memory_space<vmem>>, %arg5: memref<64x128xf32, #tpu.memory_space<vmem>>) attributes {dimension_semantics = [#tpu.dimension_semantics<parallel>], iteration_bounds = array<i64: 1>, scalar_prefetch = 0 : i64, scratch_operands = 0 : i64, tpu.core_type = #tpu.core_type<tc>, window_params = [{transform_indices = @transform_0, window_bounds = array<i64: 64, 128>}, {pipeline_mode = #tpu.pipeline_mode<synchronous>, transform_indices = @transform_1, window_bounds = array<i64: 128, 256>}, {pipeline_mode = #tpu.pipeline_mode<synchronous>, transform_indices = @transform_2, window_bounds = array<i64: 1, 256>}, {transform_indices = @transform_3, window_bounds = array<i64: 64, 128>}, {transform_indices = @transform_4, window_bounds = array<i64: 64, 128>}]} {
    %c0 = arith.constant 0 : index
    %c0_0 = arith.constant 0 : index
    %0 = vector.load %arg1[%c0, %c0_0] : memref<64x128xf32, #tpu.memory_space<vmem>>, vector<64x128xf32>
    %c0_1 = arith.constant 0 : index
    %c0_2 = arith.constant 0 : index
    %1 = vector.load %arg2[%c0_1, %c0_2] : memref<128x256xf32, #tpu.memory_space<vmem>>, vector<128x256xf32>
    %cst = arith.constant dense<0.000000e+00> : vector<64x256xf32>
    %2 = tpu.matmul %0, %1, %cst {dimension_numbers = #tpu.dot_dimension_numbers<[1], [0], [0], [1], [0, 0, 1, 1], [], []>} : vector<64x128xf32>, vector<128x256xf32>, vector<64x256xf32> -> vector<64x256xf32>
    %c0_3 = arith.constant 0 : index
    %c0_4 = arith.constant 0 : index
    %3 = vector.load %arg3[%c0_3, %c0_4] : memref<1x256xf32, #tpu.memory_space<vmem>>, vector<1x256xf32>
    %4 = vector.broadcast %3 : vector<1x256xf32> to vector<64x256xf32>
    %5 = arith.addf %2, %4 : vector<64x256xf32>
    %6 = vector.extract_strided_slice %5 {offsets = [0, 0], sizes = [64, 128], strides = [1, 1]} : vector<64x256xf32> to vector<64x128xf32>
    %7 = arith.negf %6 : vector<64x128xf32>
    %8 = math.exp %7 : vector<64x128xf32>
    %cst_5 = arith.constant 1.000000e+00 : f32
    %9 = vector.broadcast %cst_5 : f32 to vector<64x128xf32>
    %10 = arith.addf %9, %8 : vector<64x128xf32>
    %11 = arith.divf %9, %10 : vector<64x128xf32>
    %12 = vector.extract_strided_slice %5 {offsets = [0, 128], sizes = [64, 128], strides = [1, 1]} : vector<64x256xf32> to vector<64x128xf32>
    %13 = math.tanh %12 : vector<64x128xf32>
    %14 = arith.mulf %11, %0 : vector<64x128xf32>
    %cst_6 = arith.constant 1.000000e+00 : f32
    %15 = vector.broadcast %cst_6 : f32 to vector<64x128xf32>
    %16 = arith.cmpf oge, %14, %15 : vector<64x128xf32>
    %17 = arith.extui %16 : vector<64x128xi1> to vector<64x128xi32>
    %18 = arith.sitofp %17 : vector<64x128xi32> to vector<64x128xf32>
    %c0_7 = arith.constant 0 : index
    %c0_8 = arith.constant 0 : index
    %19 = vector.load %arg4[%c0_7, %c0_8] : memref<64x128xf32, #tpu.memory_space<vmem>>, vector<64x128xf32>
    tpu.vector_store %arg4[%c0_7, %c0_8], %18 {strides = array<i32>} : memref<64x128xf32, #tpu.memory_space<vmem>>, vector<64x128xf32>,
    %cst_9 = arith.constant 0.000000e+00 : f32
    %20 = vector.broadcast %cst_9 : f32 to vector<64x128xf32>
    %21 = arith.select %16, %20, %14 : vector<64x128xi1>, vector<64x128xf32>
    %22 = arith.addf %21, %13 : vector<64x128xf32>
    %c0_10 = arith.constant 0 : index
    %c0_11 = arith.constant 0 : index
    %23 = vector.load %arg5[%c0_10, %c0_11] : memref<64x128xf32, #tpu.memory_space<vmem>>, vector<64x128xf32>
    tpu.vector_store %arg5[%c0_10, %c0_11], %22 {strides = array<i32>} : memref<64x128xf32, #tpu.memory_space<vmem>>, vector<64x128xf32>,
    return
  }
  func.func @transform_0(%arg0: i32) -> (i32, i32) {
    %c0_i32 = arith.constant 0 : i32
    %c0_i32_0 = arith.constant 0 : i32
    return %arg0, %c0_i32 : i32, i32
  }
  func.func @transform_1(%arg0: i32) -> (i32, i32) {
    %c0_i32 = arith.constant 0 : i32
    %c0_i32_0 = arith.constant 0 : i32
    %c0_i32_1 = arith.constant 0 : i32
    return %c0_i32, %c0_i32_0 : i32, i32
  }
  func.func @transform_2(%arg0: i32) -> (i32, i32) {
    %c0_i32 = arith.constant 0 : i32
    %c0_i32_0 = arith.constant 0 : i32
    %c0_i32_1 = arith.constant 0 : i32
    return %c0_i32, %c0_i32_0 : i32, i32
  }
  func.func @transform_3(%arg0: i32) -> (i32, i32) {
    %c0_i32 = arith.constant 0 : i32
    %c0_i32_0 = arith.constant 0 : i32
    return %arg0, %c0_i32 : i32, i32
  }
  func.func @transform_4(%arg0: i32) -> (i32, i32) {
    %c0_i32 = arith.constant 0 : i32
    %c0_i32_0 = arith.constant 0 : i32
    return %arg0, %c0_i32 : i32, i32
  }
}

</mosaic_0001>

<llo_original>
// kernel: tpu_custom_call.1
$region0: #{tpu_custom_call.1}
  #allocation0 [shape = 'u32[]', space=smem, size = 0x4, offset = 0x4, fixed_abs, tag = 'smem constant byte address 0x4 - core index']
  #allocation1 [shape = 'u32[72,128]{1,0:T(1,128)}', space=vmem, size = 0x9000, scoped, tag = 'internal scratch']
  %s0 = inlined_call_operand.hbm [shape: f32[64,128], index: 0, kind: input, shape index: {}]
  %s1 = inlined_call_operand.hbm [shape: f32[128,256], index: 1, kind: input, shape index: {}]
  %s2 = inlined_call_operand.hbm [shape: f32[1,256], index: 2, kind: input, shape index: {}]
  %s3 = inlined_call_operand.hbm [shape: f32[64,128], index: 3, kind: output, shape index: {0}]
  %s4 = inlined_call_operand.hbm [shape: f32[64,128], index: 4, kind: output, shape index: {1}]
  %5 = xla_tuple %s3, %s4
  %s6 = sld [smem:[#allocation0]]
  $region42: #{tpu_custom_call.1} parent=0
    _
  %s8 = ssub.s32 1, %s6
  %s9 = scalar_select 0, %s8, %s6
  $region1: #{tpu_custom_call.1} parent=0
    #allocation2 [shape = 'u8[32768]{0}', space=vmem, size = 0x8000, scoped, tag = 'input window, operand 0, single buffered']
    #allocation3 [shape = 's32[1]{0}', space=sflag, size = 0x4, scoped, tag = 'scoped memory for tpu_custom_call.1']
    #allocation4 [shape = 's32[1]{0}', space=sflag, size = 0x4, scoped, tag = 'scoped memory for tpu_custom_call.1']
    #allocation5 [shape = 'u8[131072]{0}', space=vmem, size = 0x20000, scoped, tag = 'input window, operand 1, single buffered']
    #allocation6 [shape = 's32[1]{0}', space=sflag, size = 0x4, scoped, tag = 'scoped memory for tpu_custom_call.1']
    #allocation7 [shape = 'u8[1024]{0}', space=vmem, size = 0x400, scoped, tag = 'input window, operand 2, single buffered']
    #allocation8 [shape = 'u8[32768]{0}', space=vmem, size = 0x8000, scoped, tag = 'output window, operand 0, single buffered']
    #allocation9 [shape = 'u8[32768]{0}', space=vmem, size = 0x8000, scoped, tag = 'output window, operand 1, single buffered']
    #allocation10 [shape = 's32[1]{0}', space=sflag, size = 0x4, scoped, tag = 'scoped memory for tpu_custom_call.1']
    %10 = vsyncpa [#allocation3], 0
    %11 = vsyncpa [#allocation6], 0
    %12 = vsyncpa [#allocation4], 0
    %13 = vsyncpa [#allocation10], 0
    // Predicated region
    $region2: #{tpu_custom_call.1} parent=1 // pred_check
      _
    $region3: #{tpu_custom_call.1} parent=1 // pred_check_branch
      %15 = sbr.rel (0) target = $region5
    $region4: #{tpu_custom_call.1} parent=1 // pred_region
      %17 = vsyncadd [#allocation3], 0
      %s18 = sshll.u32 %s0, 4
      %s19 = int_to_ptr.hbm [resolvable:$true] %s18
      %s20 = sshll.u32 [#allocation2], 4
      %s21 = int_to_ptr.vmem [resolvable:$true] %s20
      %26 = dma.hbm_to_vmem [thread:$0]  %s19, 1024, %s21, [#allocation3], 128, 128, 8
    $region5: #{tpu_custom_call.1} parent=1 // pred_fallthru
      _
    // Predicated region
    $region6: #{tpu_custom_call.1} parent=1 // pred_check
      _
    $region7: #{tpu_custom_call.1} parent=1 // pred_check_branch
      %28 = sbr.rel (0) target = $region9
    $region8: #{tpu_custom_call.1} parent=1 // pred_region
      %30 = vsyncadd [#allocation6], 0
      %s31 = sshll.u32 %s1, 4
      %s32 = int_to_ptr.hbm [resolvable:$true] %s31
      %s33 = sshll.u32 [#allocation5], 4
      %s34 = int_to_ptr.vmem [resolvable:$true] %s33
      %39 = dma.hbm_to_vmem [thread:$0]  %s32, 4096, %s34, [#allocation6], 256, 256, 16
    $region9: #{tpu_custom_call.1} parent=1 // pred_fallthru
      _
    // Predicated region
    $region10: #{tpu_custom_call.1} parent=1 // pred_check
      _
    $region11: #{tpu_custom_call.1} parent=1 // pred_check_branch
      %41 = sbr.rel (0) target = $region13
    $region12: #{tpu_custom_call.1} parent=1 // pred_region
      %43 = vsyncadd [#allocation6], 0
      %s45 = sshll.u32 %s2, 4
      %s46 = int_to_ptr.hbm [resolvable:$true] %s45
      %s47 = sshll.u32 [#allocation7], 4
      %s48 = int_to_ptr.vmem [resolvable:$true] %s47
      %50 = dma.hbm_to_vmem [thread:$0]  %s46, 32, %s48, [#allocation6]
    $region13: #{tpu_custom_call.1} parent=1 // pred_fallthru
      _
    // Predicated region
    $region14: #{tpu_custom_call.1} parent=1 // pred_check
      _
    $region15: #{tpu_custom_call.1} parent=1 // pred_check_branch
      %52 = sbr.rel (0) target = $region17
    $region16: #{tpu_custom_call.1} parent=1 // pred_region
      %54 = dma.done [#allocation3], 1024
    $region17: #{tpu_custom_call.1} parent=1 // pred_fallthru
      _
    // Predicated region
    $region18: #{tpu_custom_call.1} parent=1 // pred_check
      _
    $region19: #{tpu_custom_call.1} parent=1 // pred_check_branch
      %56 = sbr.rel (0) target = $region21
    $region20: #{tpu_custom_call.1} parent=1 // pred_region
      %58 = dma.done [#allocation6], 4096
    $region21: #{tpu_custom_call.1} parent=1 // pred_fallthru
      _
    // Predicated region
    $region22: #{tpu_custom_call.1} parent=1 // pred_check
      _
    $region23: #{tpu_custom_call.1} parent=1 // pred_check_branch
      %60 = sbr.rel (0) target = $region25
    $region24: #{tpu_custom_call.1} parent=1 // pred_region
      %62 = dma.done [#allocation6], 32
    $region25: #{tpu_custom_call.1} parent=1 // pred_fallthru
      _
    %v63 = vld [vmem:[#allocation2] sm:$0xff]
    %v64 = vld [vmem:[#allocation2 + $0x8] sm:$0xff]
    %v65 = vld [vmem:[#allocation2 + $0x10] sm:$0xff]
    %v66 = vld [vmem:[#allocation2 + $0x18] sm:$0xff]
    %v67 = vld [vmem:[#allocation2 + $0x20] sm:$0xff]
    %v68 = vld [vmem:[#allocation2 + $0x28] sm:$0xff]
    %v69 = vld [vmem:[#allocation2 + $0x30] sm:$0xff]
    %v70 = vld [vmem:[#allocation2 + $0x38] sm:$0xff]
    %v71 = vld [vmem:[#allocation5] sm:$0xff]
    %v72 = vld [vmem:[#allocation5 + $0x8] sm:$0xff]
    %v73 = vld [vmem:[#allocation5 + $0x10] sm:$0xff]
    %v74 = vld [vmem:[#allocation5 + $0x18] sm:$0xff]
    %v75 = vld [vmem:[#allocation5 + $0x20] sm:$0xff]
    %v76 = vld [vmem:[#allocation5 + $0x28] sm:$0xff]
    %v77 = vld [vmem:[#allocation5 + $0x30] sm:$0xff]
    %v78 = vld [vmem:[#allocation5 + $0x38] sm:$0xff]
    %v79 = vld [vmem:[#allocation5 + $0x40] sm:$0xff]
    %v80 = vld [vmem:[#allocation5 + $0x48] sm:$0xff]
    %v81 = vld [vmem:[#allocation5 + $0x50] sm:$0xff]
    %v82 = vld [vmem:[#allocation5 + $0x58] sm:$0xff]
    %v83 = vld [vmem:[#allocation5 + $0x60] sm:$0xff]
    %v84 = vld [vmem:[#allocation5 + $0x68] sm:$0xff]
    %v85 = vld [vmem:[#allocation5 + $0x70] sm:$0xff]
    %v86 = vld [vmem:[#allocation5 + $0x78] sm:$0xff]
    %v87 = vld [vmem:[#allocation5 + $0x80] sm:$0xff]
    %v88 = vld [vmem:[#allocation5 + $0x88] sm:$0xff]
    %v89 = vld [vmem:[#allocation5 + $0x90] sm:$0xff]
    %v90 = vld [vmem:[#allocation5 + $0x98] sm:$0xff]
    %v91 = vld [vmem:[#allocation5 + $0xa0] sm:$0xff]
    %v92 = vld [vmem:[#allocation5 + $0xa8] sm:$0xff]
    %v93 = vld [vmem:[#allocation5 + $0xb0] sm:$0xff]
    %v94 = vld [vmem:[#allocation5 + $0xb8] sm:$0xff]
    %v95 = vld [vmem:[#allocation5 + $0xc0] sm:$0xff]
    %v96 = vld [vmem:[#allocation5 + $0xc8] sm:$0xff]
    %v97 = vld [vmem:[#allocation5 + $0xd0] sm:$0xff]
    %v98 = vld [vmem:[#allocation5 + $0xd8] sm:$0xff]
    %v99 = vld [vmem:[#allocation5 + $0xe0] sm:$0xff]
    %v100 = vld [vmem:[#allocation5 + $0xe8] sm:$0xff]
    %v101 = vld [vmem:[#allocation5 + $0xf0] sm:$0xff]
    %v102 = vld [vmem:[#allocation5 + $0xf8] sm:$0xff]
    %v103 = vld [vmem:[#allocation7] sm:$0x3]
    %v105 = vperm.slane %v103, 0
    %v106 = vperm.slane %v103, 1
    %109 = vmatpush.msra.mxu0 %v101
    %110 = vmatpush.msra.mxu0 %v99
    %111 = vmatpush.msra.mxu0 %v97
    %112 = vmatpush.msra.mxu0 %v95
    %113 = vmatpush.msra.mxu0 %v93
    %114 = vmatpush.msra.mxu0 %v91
    %115 = vmatpush.msra.mxu0 %v89
    %116 = vmatpush.msra.mxu0 %v87
    %117 = vmatpush.msra.mxu0 %v85
    %118 = vmatpush.msra.mxu0 %v83
    %119 = vmatpush.msra.mxu0 %v81
    %120 = vmatpush.msra.mxu0 %v79
    %121 = vmatpush.msra.mxu0 %v77
    %122 = vmatpush.msra.mxu0 %v75
    %123 = vmatpush.msra.mxu0 %v73
    %124 = vmatpush.msra.mxu0 %v71
    %125 = vmatmul.f32.gmra.mxu0 %v63
    %v126 = vpop.f32.mrf.mxu0
    %v127 = vadd.f32 %v105, %v126
    %128 = vmatmul.f32.gmra.mxu0 %v64
    %v129 = vpop.f32.mrf.mxu0
    %v130 = vadd.f32 %v105, %v129
    %131 = vmatmul.f32.gmra.mxu0 %v65
    %v132 = vpop.f32.mrf.mxu0
    %v133 = vadd.f32 %v105, %v132
    %134 = vmatmul.f32.gmra.mxu0 %v66
    %v135 = vpop.f32.mrf.mxu0
    %v136 = vadd.f32 %v105, %v135
    %137 = vmatmul.f32.gmra.mxu0 %v67
    %v138 = vpop.f32.mrf.mxu0
    %v139 = vadd.f32 %v105, %v138
    %140 = vmatmul.f32.gmra.mxu0 %v68
    %v141 = vpop.f32.mrf.mxu0
    %v142 = vadd.f32 %v105, %v141
    %143 = vmatmul.f32.gmra.mxu0 %v69
    %v144 = vpop.f32.mrf.mxu0
    %v145 = vadd.f32 %v105, %v144
    %146 = vmatmul.f32.gmra.mxu0 %v70
    %v147 = vpop.f32.mrf.mxu0
    %v148 = vadd.f32 %v105, %v147
    %149 = vdwg.mxu0
    %150 = vmatpush.msra.mxu0 %v102
    %151 = vmatpush.msra.mxu0 %v100
    %152 = vmatpush.msra.mxu0 %v98
    %153 = vmatpush.msra.mxu0 %v96
    %154 = vmatpush.msra.mxu0 %v94
    %155 = vmatpush.msra.mxu0 %v92
    %156 = vmatpush.msra.mxu0 %v90
    %157 = vmatpush.msra.mxu0 %v88
    %158 = vmatpush.msra.mxu0 %v86
    %159 = vmatpush.msra.mxu0 %v84
    %160 = vmatpush.msra.mxu0 %v82
    %161 = vmatpush.msra.mxu0 %v80
    %162 = vmatpush.msra.mxu0 %v78
    %163 = vmatpush.msra.mxu0 %v76
    %164 = vmatpush.msra.mxu0 %v74
    %165 = vmatpush.msra.mxu0 %v72
    %166 = vmatmul.f32.gmra.mxu0 %v63
    %v167 = vpop.f32.mrf.mxu0
    %v168 = vadd.f32 %v106, %v167
    %169 = vmatmul.f32.gmra.mxu0 %v64
    %v170 = vpop.f32.mrf.mxu0
    %v171 = vadd.f32 %v106, %v170
    %172 = vmatmul.f32.gmra.mxu0 %v65
    %v173 = vpop.f32.mrf.mxu0
    %v174 = vadd.f32 %v106, %v173
    %175 = vmatmul.f32.gmra.mxu0 %v66
    %v176 = vpop.f32.mrf.mxu0
    %v177 = vadd.f32 %v106, %v176
    %178 = vmatmul.f32.gmra.mxu0 %v67
    %v179 = vpop.f32.mrf.mxu0
    %v180 = vadd.f32 %v106, %v179
    %181 = vmatmul.f32.gmra.mxu0 %v68
    %v182 = vpop.f32.mrf.mxu0
    %v183 = vadd.f32 %v106, %v182
    %184 = vmatmul.f32.gmra.mxu0 %v69
    %v185 = vpop.f32.mrf.mxu0
    %v186 = vadd.f32 %v106, %v185
    %187 = vmatmul.f32.gmra.mxu0 %v70
    %v188 = vpop.f32.mrf.mxu0
    %v189 = vadd.f32 %v106, %v188
    %190 = vdwg.mxu0
    %v191 = vxor.u32 %v127, 2147483648
    %v192 = vxor.u32 %v130, 2147483648
    %v193 = vxor.u32 %v133, 2147483648
    %v194 = vxor.u32 %v136, 2147483648
    %v195 = vxor.u32 %v139, 2147483648
    %v196 = vxor.u32 %v142, 2147483648
    %v197 = vxor.u32 %v145, 2147483648
    %v198 = vxor.u32 %v148, 2147483648
    %v199 = vmul.f32 %v191, 1.442695
    %v200 = vpow.pop %v199
    %v201 = vmul.f32 %v192, 1.442695
    %v202 = vpow.pop %v201
    %v203 = vmul.f32 %v193, 1.442695
    %v204 = vpow.pop %v203
    %v205 = vmul.f32 %v194, 1.442695
    %v206 = vpow.pop %v205
    %v207 = vmul.f32 %v195, 1.442695
    %v208 = vpow.pop %v207
    %v209 = vmul.f32 %v196, 1.442695
    %v210 = vpow.pop %v209
    %v211 = vmul.f32 %v197, 1.442695
    %v212 = vpow.pop %v211
    %v213 = vmul.f32 %v198, 1.442695
    %v214 = vpow.pop %v213
    %v215 = vadd.f32 %v200, 1.0
    %v216 = vadd.f32 %v202, 1.0
    %v217 = vadd.f32 %v204, 1.0
    %v218 = vadd.f32 %v206, 1.0
    %v219 = vadd.f32 %v208, 1.0
    %v220 = vadd.f32 %v210, 1.0
    %v221 = vadd.f32 %v212, 1.0
    %v222 = vadd.f32 %v214, 1.0
    %v223 = vrcp.pop %v215
    %v224 = vmul.f32 %v215, %v223
    %v225 = vsub.f32 1.0, %v224
    %v226 = vmul.f32 %v223, %v225
    %v227 = vadd.f32 %v223, %v226
    %vm228 = vweird.f32 %v215
    %vm229 = vweird.f32 %v223
    %vm230 = vmor %vm228, %vm229
    %v231 = vsel %vm230, %v223, %v227
    %v232 = vand.u32 2147483647, %v215
    %vm233 = vcmp.eq.f32.partialorder %v232, 8.507059e+37
    %v234 = vand.u32 %v215, 2147483648
    %v235 = vor.u32 1.1754944e-38, %v234
    %v236 = vsel %vm233, %v235, %v231
    %v237 = vmul.f32 1.0, %v236
    %v238 = vrcp.pop %v216
    %v239 = vmul.f32 %v216, %v238
    %v240 = vsub.f32 1.0, %v239
    %v241 = vmul.f32 %v238, %v240
    %v242 = vadd.f32 %v238, %v241
    %vm243 = vweird.f32 %v216
    %vm244 = vweird.f32 %v238
    %vm245 = vmor %vm243, %vm244
    %v246 = vsel %vm245, %v238, %v242
    %v247 = vand.u32 2147483647, %v216
    %vm248 = vcmp.eq.f32.partialorder %v247, 8.507059e+37
    %v249 = vand.u32 %v216, 2147483648
    %v250 = vor.u32 1.1754944e-38, %v249
    %v251 = vsel %vm248, %v250, %v246
    %v252 = vmul.f32 1.0, %v251
    %v253 = vrcp.pop %v217
    %v254 = vmul.f32 %v217, %v253
    %v255 = vsub.f32 1.0, %v254
    %v256 = vmul.f32 %v253, %v255
    %v257 = vadd.f32 %v253, %v256
    %vm258 = vweird.f32 %v217
    %vm259 = vweird.f32 %v253
    %vm260 = vmor %vm258, %vm259
    %v261 = vsel %vm260, %v253, %v257
    %v262 = vand.u32 2147483647, %v217
    %vm263 = vcmp.eq.f32.partialorder %v262, 8.507059e+37
    %v264 = vand.u32 %v217, 2147483648
    %v265 = vor.u32 1.1754944e-38, %v264
    %v266 = vsel %vm263, %v265, %v261
    %v267 = vmul.f32 1.0, %v266
    %v268 = vrcp.pop %v218
    %v269 = vmul.f32 %v218, %v268
    %v270 = vsub.f32 1.0, %v269
    %v271 = vmul.f32 %v268, %v270
    %v272 = vadd.f32 %v268, %v271
    %vm273 = vweird.f32 %v218
    %vm274 = vweird.f32 %v268
    %vm275 = vmor %vm273, %vm274
    %v276 = vsel %vm275, %v268, %v272
    %v277 = vand.u32 2147483647, %v218
    %vm278 = vcmp.eq.f32.partialorder %v277, 8.507059e+37
    %v279 = vand.u32 %v218, 2147483648
    %v280 = vor.u32 1.1754944e-38, %v279
    %v281 = vsel %vm278, %v280, %v276
    %v282 = vmul.f32 1.0, %v281
    %v283 = vrcp.pop %v219
    %v284 = vmul.f32 %v219, %v283
    %v285 = vsub.f32 1.0, %v284
    %v286 = vmul.f32 %v283, %v285
    %v287 = vadd.f32 %v283, %v286
    %vm288 = vweird.f32 %v219
    %vm289 = vweird.f32 %v283
    %vm290 = vmor %vm288, %vm289
    %v291 = vsel %vm290, %v283, %v287
    %v292 = vand.u32 2147483647, %v219
    %vm293 = vcmp.eq.f32.partialorder %v292, 8.507059e+37
    %v294 = vand.u32 %v219, 2147483648
    %v295 = vor.u32 1.1754944e-38, %v294
    %v296 = vsel %vm293, %v295, %v291
    %v297 = vmul.f32 1.0, %v296
    %v298 = vrcp.pop %v220
    %v299 = vmul.f32 %v220, %v298
    %v300 = vsub.f32 1.0, %v299
    %v301 = vmul.f32 %v298, %v300
    %v302 = vadd.f32 %v298, %v301
    %vm303 = vweird.f32 %v220
    %vm304 = vweird.f32 %v298
    %vm305 = vmor %vm303, %vm304
    %v306 = vsel %vm305, %v298, %v302
    %v307 = vand.u32 2147483647, %v220
    %vm308 = vcmp.eq.f32.partialorder %v307, 8.507059e+37
    %v309 = vand.u32 %v220, 2147483648
    %v310 = vor.u32 1.1754944e-38, %v309
    %v311 = vsel %vm308, %v310, %v306
    %v312 = vmul.f32 1.0, %v311
    %v313 = vrcp.pop %v221
    %v314 = vmul.f32 %v221, %v313
    %v315 = vsub.f32 1.0, %v314
    %v316 = vmul.f32 %v313, %v315
    %v317 = vadd.f32 %v313, %v316
    %vm318 = vweird.f32 %v221
    %vm319 = vweird.f32 %v313
    %vm320 = vmor %vm318, %vm319
    %v321 = vsel %vm320, %v313, %v317
    %v322 = vand.u32 2147483647, %v221
    %vm323 = vcmp.eq.f32.partialorder %v322, 8.507059e+37
    %v324 = vand.u32 %v221, 2147483648
    %v325 = vor.u32 1.1754944e-38, %v324
    %v326 = vsel %vm323, %v325, %v321
    %v327 = vmul.f32 1.0, %v326
    %v328 = vrcp.pop %v222
    %v329 = vmul.f32 %v222, %v328
    %v330 = vsub.f32 1.0, %v329
    %v331 = vmul.f32 %v328, %v330
    %v332 = vadd.f32 %v328, %v331
    %vm333 = vweird.f32 %v222
    %vm334 = vweird.f32 %v328
    %vm335 = vmor %vm333, %vm334
    %v336 = vsel %vm335, %v328, %v332
    %v337 = vand.u32 2147483647, %v222
    %vm338 = vcmp.eq.f32.partialorder %v337, 8.507059e+37
    %v339 = vand.u32 %v222, 2147483648
    %v340 = vor.u32 1.1754944e-38, %v339
    %v341 = vsel %vm338, %v340, %v336
    %v342 = vmul.f32 1.0, %v341
    %v343 = vtanh.pop %v168
    %v344 = vtanh.pop %v171
    %v345 = vtanh.pop %v174
    %v346 = vtanh.pop %v177
    %v347 = vtanh.pop %v180
    %v348 = vtanh.pop %v183
    %v349 = vtanh.pop %v186
    %v350 = vtanh.pop %v189
    %v351 = vmul.f32 %v237, %v63
    %v352 = vmul.f32 %v252, %v64
    %v353 = vmul.f32 %v267, %v65
    %v354 = vmul.f32 %v282, %v66
    %v355 = vmul.f32 %v297, %v67
    %v356 = vmul.f32 %v312, %v68
    %v357 = vmul.f32 %v327, %v69
    %v358 = vmul.f32 %v342, %v70
    %vm359 = vcmp.ge.f32.partialorder %v351, 1.0
    %vm360 = vcmp.ge.f32.partialorder %v352, 1.0
    %vm361 = vcmp.ge.f32.partialorder %v353, 1.0
    %vm362 = vcmp.ge.f32.partialorder %v354, 1.0
    %vm363 = vcmp.ge.f32.partialorder %v355, 1.0
    %vm364 = vcmp.ge.f32.partialorder %v356, 1.0
    %vm365 = vcmp.ge.f32.partialorder %v357, 1.0
    %vm366 = vcmp.ge.f32.partialorder %v358, 1.0
    %v367 = vsel %vm359, 1, 0
    %v368 = vsel %vm360, 1, 0
    %v369 = vsel %vm361, 1, 0
    %v370 = vsel %vm362, 1, 0
    %v371 = vsel %vm363, 1, 0
    %v372 = vsel %vm364, 1, 0
    %v373 = vsel %vm365, 1, 0
    %v374 = vsel %vm366, 1, 0
    %v375 = vcvt.s32.f32 %v367
    %v376 = vcvt.s32.f32 %v368
    %v377 = vcvt.s32.f32 %v369
    %v378 = vcvt.s32.f32 %v370
    %v379 = vcvt.s32.f32 %v371
    %v380 = vcvt.s32.f32 %v372
    %v381 = vcvt.s32.f32 %v373
    %v382 = vcvt.s32.f32 %v374
    %383 = vst [vmem:[#allocation8] sm:$0xff] %v375
    %384 = vst [vmem:[#allocation8 + $0x8] sm:$0xff] %v376
    %385 = vst [vmem:[#allocation8 + $0x10] sm:$0xff] %v377
    %386 = vst [vmem:[#allocation8 + $0x18] sm:$0xff] %v378
    %387 = vst [vmem:[#allocation8 + $0x20] sm:$0xff] %v379
    %388 = vst [vmem:[#allocation8 + $0x28] sm:$0xff] %v380
    %389 = vst [vmem:[#allocation8 + $0x30] sm:$0xff] %v381
    %390 = vst [vmem:[#allocation8 + $0x38] sm:$0xff] %v382
    %v391 = vsel %vm359, 0.0, %v351
    %v392 = vsel %vm360, 0.0, %v352
    %v393 = vsel %vm361, 0.0, %v353
    %v394 = vsel %vm362, 0.0, %v354
    %v395 = vsel %vm363, 0.0, %v355
    %v396 = vsel %vm364, 0.0, %v356
    %v397 = vsel %vm365, 0.0, %v357
    %v398 = vsel %vm366, 0.0, %v358
    %v399 = vadd.f32 %v391, %v343
    %v400 = vadd.f32 %v392, %v344
    %v401 = vadd.f32 %v393, %v345
    %v402 = vadd.f32 %v394, %v346
    %v403 = vadd.f32 %v395, %v347
    %v404 = vadd.f32 %v396, %v348
    %v405 = vadd.f32 %v397, %v349
    %v406 = vadd.f32 %v398, %v350
    %407 = vst [vmem:[#allocation9] sm:$0xff] %v399
    %408 = vst [vmem:[#allocation9 + $0x8] sm:$0xff] %v400
    %409 = vst [vmem:[#allocation9 + $0x10] sm:$0xff] %v401
    %410 = vst [vmem:[#allocation9 + $0x18] sm:$0xff] %v402
    %411 = vst [vmem:[#allocation9 + $0x20] sm:$0xff] %v403
    %412 = vst [vmem:[#allocation9 + $0x28] sm:$0xff] %v404
    %413 = vst [vmem:[#allocation9 + $0x30] sm:$0xff] %v405
    %414 = vst [vmem:[#allocation9 + $0x38] sm:$0xff] %v406
    // Predicated region
    $region26: #{tpu_custom_call.1} parent=1 // pred_check
      _
    $region27: #{tpu_custom_call.1} parent=1 // pred_check_branch
      %416 = sbr.rel (0) target = $region29
    $region28: #{tpu_custom_call.1} parent=1 // pred_region
      %418 = vsyncadd [#allocation4], 0
      %s419 = sshll.u32 [#allocation8], 4
      %s420 = int_to_ptr.vmem [resolvable:$true] %s419
      %s421 = sshll.u32 %s3, 4
      %s422 = int_to_ptr.hbm [resolvable:$true] %s421
      %427 = dma.vmem_to_hbm [thread:$0]  %s420, 1024, %s422, [#allocation4], 128, 128, 8
    $region29: #{tpu_custom_call.1} parent=1 // pred_fallthru
      _
    // Predicated region
    $region30: #{tpu_custom_call.1} parent=1 // pred_check
      _
    $region31: #{tpu_custom_call.1} parent=1 // pred_check_branch
      %429 = sbr.rel (0) target = $region33
    $region32: #{tpu_custom_call.1} parent=1 // pred_region
      %431 = vsyncadd [#allocation10], 0
      %s432 = sshll.u32 [#allocation9], 4
      %s433 = int_to_ptr.vmem [resolvable:$true] %s432
      %s434 = sshll.u32 %s4, 4
      %s435 = int_to_ptr.hbm [resolvable:$true] %s434
      %440 = dma.vmem_to_hbm [thread:$0]  %s433, 1024, %s435, [#allocation10], 128, 128, 8
    $region33: #{tpu_custom_call.1} parent=1 // pred_fallthru
      _
    // Predicated region
    $region34: #{tpu_custom_call.1} parent=1 // pred_check
      _
    $region35: #{tpu_custom_call.1} parent=1 // pred_check_branch
      %442 = sbr.rel (0) target = $region37
    $region36: #{tpu_custom_call.1} parent=1 // pred_region
      %444 = dma.done [#allocation4], 1024
    $region37: #{tpu_custom_call.1} parent=1 // pred_fallthru
      _
    // Predicated region
    $region38: #{tpu_custom_call.1} parent=1 // pred_check
      _
    $region39: #{tpu_custom_call.1} parent=1 // pred_check_branch
      %446 = sbr.rel (0) target = $region41
    $region40: #{tpu_custom_call.1} parent=1 // pred_region
      %448 = dma.done [#allocation10], 1024
    $region41: #{tpu_custom_call.1} parent=1 // pred_fallthru
      _
    %449 = vsyncpa [#allocation3], 1
    %450 = vsyncpa [#allocation6], 1
    %451 = vsyncpa [#allocation4], 1
    %452 = vsyncpa [#allocation10], 1

</llo_original>
